<compile_context>
chip_gen: v7x
topology: tpu7x:2x2x1
jax: 0.10.0
libtpu: 0.0.40
codegen_flags: <defaults>
</compile_context>

<pallas_src>
import functools

import jax
import jax.numpy as jnp
from jax.experimental import pallas as pl
from jax.experimental.pallas import tpu as pltpu

_LANES = 128


def _scores_kernel(q_ref, k_ref, o_ref, q_sc, m_sc, l_sc, acc_sc, *,
                   scale, compute_dtype, kv_len, kv_tile, mask_kv_tail):
    """One (batch, q-tile, kv-tile) grid step of flash-style attention with V := K."""
    ki = pl.program_id(2)

    @pl.when(ki == 0)
    def _():
        # Hoisted: scale fold + (optional bf16) cast of the Q tile, done once per
        # (batch, q-tile) and reused by every step of the kv reduction axis.
        q_sc[...] = (q_ref[0] * scale).astype(compute_dtype)
        m_sc[...] = jnp.full_like(m_sc, -jnp.inf)
        l_sc[...] = jnp.zeros_like(l_sc)
        acc_sc[...] = jnp.zeros_like(acc_sc)

    q = q_sc[...]                                    # (TQ, D) compute dtype
    k = k_ref[0].astype(compute_dtype)               # (TK, D) compute dtype; also V

    if mask_kv_tail:
        # The kv tail block reads unspecified data past the sequence end; zero
        # those K/V rows so the PV matmul cannot pick up NaN/Inf garbage.
        row_ids = ki * kv_tile + jax.lax.broadcasted_iota(jnp.int32, k.shape, 0)
        k = jnp.where(row_ids < kv_len, k, jnp.zeros_like(k))

    # QK^T contracted on the shared last dim (no XLU transpose of K); bf16 (or
    # input-dtype) operands with f32 accumulation on the MXU.
    s = jax.lax.dot_general(
        q, k,
        dimension_numbers=(((1,), (1,)), ((), ())),
        preferred_element_type=jnp.float32,
    )                                                # (TQ, TK) f32

    if mask_kv_tail:
        col_ids = ki * kv_tile + jax.lax.broadcasted_iota(jnp.int32, s.shape, 1)
        s = jnp.where(col_ids < kv_len, s, -jnp.inf)

    # Online (streaming) softmax accumulation across kv tiles.
    m_prev = m_sc[...]
    m_new = jnp.maximum(m_prev, jnp.max(s, axis=-1, keepdims=True))
    alpha = jnp.exp(m_prev - m_new)
    p = jnp.exp(s - m_new)
    l_sc[...] = alpha * l_sc[...] + jnp.sum(p, axis=-1, keepdims=True)
    # PV matmul: P cast to the compute dtype, f32 accumulation.  V := K.
    acc_sc[...] = alpha * acc_sc[...] + jnp.dot(
        p.astype(compute_dtype), k, preferred_element_type=jnp.float32)
    m_sc[...] = m_new

    @pl.when(ki == pl.num_programs(2) - 1)
    def _():
        o_ref[0] = (acc_sc[...] *
                    pl.reciprocal(l_sc[...], approx=True)).astype(o_ref.dtype)


def _sublane_multiple(dtype):
    """Sublane packing granularity: 8 for f32, 16 for bf16, 32 for int8/fp8."""
    return max(8, 32 // jnp.dtype(dtype).itemsize)


def _pick_tile(s, max_tile, sublane):
    """Tile <= ~max_tile honoring the sublane constraint.  Prefers an exact
    divisor of s (no masked tail); otherwise returns a capped tile and the
    caller uses a pl.cdiv grid with in-kernel tail masking."""
    if s <= max_tile:
        return s                                     # full extent (always legal)
    cap = max(max_tile - max_tile % sublane, sublane)
    t = cap
    while t >= max(sublane, cap // 2):
        if s % t == 0:
            return t
        t -= sublane
    return cap


def scores_forward(x1, x2=None, dim=1, *,
                   max_q_tile=256, max_kv_tile=256,
                   use_bf16_matmul=True, pad_lane_dim=True,
                   vmem_limit_bytes=None):
    """Pallas equivalent of Scores.forward (with V := K, see TODO above)."""
    q_in = x1
    # When x2 is None this is self-attention: x1 is both the Q and K operand.
    k_in = x1 if x2 is None else x2

    B, sq, D = q_in.shape
    bk, sk, dk = k_in.shape
    assert bk == B and dk == D, "Q/K batch and head dims must match"

    # Matches the PyTorch module: scale uses K.size(dim) with dim=1 (sequence).
    scale = float(k_in.shape[dim]) ** -0.5

    out_dtype = q_in.dtype
    if use_bf16_matmul and q_in.dtype == jnp.float32:
        compute_dtype = jnp.bfloat16                 # MXU-native; f32 accumulation kept
    else:
        compute_dtype = q_in.dtype

    # Lane-dense output / PV matmul: pad the head dim to a multiple of 128.  The
    # zero columns are exact no-ops for QK^T and produce zero output columns that
    # are sliced off below (pure layout plumbing in the wrapper).
    if pad_lane_dim and D % _LANES != 0:
        dp = pl.cdiv(D, _LANES) * _LANES
        pad = ((0, 0), (0, 0), (0, dp - D))
        q_arr = jnp.pad(q_in, pad)
        k_arr = q_arr if x2 is None else jnp.pad(k_in, pad)
    else:
        dp = D
        q_arr, k_arr = q_in, k_in

    sub = _sublane_multiple(compute_dtype)
    tq = _pick_tile(sq, max_q_tile, sub)
    tk = _pick_tile(sk, max_kv_tile, sub)
    mask_kv_tail = (sk % tk) != 0
    # (A q-tail remainder needs no in-kernel handling: Pallas clamps the
    #  boundary-block output writeback to the valid rows.)

    kernel = functools.partial(
        _scores_kernel, scale=scale, compute_dtype=compute_dtype,
        kv_len=sk, kv_tile=tk, mask_kv_tail=mask_kv_tail)

    q_spec = pl.BlockSpec((1, tq, dp), lambda b, qi, ki: (b, qi, 0))
    k_spec = pl.BlockSpec((1, tk, dp), lambda b, qi, ki: (b, ki, 0))
    o_spec = pl.BlockSpec((1, tq, dp), lambda b, qi, ki: (b, qi, 0))

    cp_kwargs = dict(dimension_semantics=("parallel", "parallel", "arbitrary"))
    if vmem_limit_bytes is not None:
        # v5e/v6e: raise this (defaults 16/32 MiB of 128 MiB physical) when using
        # large tiles; on v7x keep the total <= ~48 MiB (64 MiB physical VMEM).
        cp_kwargs["vmem_limit_bytes"] = int(vmem_limit_bytes)

    out = pl.pallas_call(
        kernel,
        out_shape=jax.ShapeDtypeStruct((B, sq, dp), out_dtype),
        grid_spec=pltpu.PrefetchScalarGridSpec(
            num_scalar_prefetch=0,
            # kv (reduction) axis last; the (B, ceil(Sq/tq)) parallel axes feed
            # both v7x TensorCores -- keep B * ceil(Sq/tq) >= 2 for occupancy.
            grid=(B, pl.cdiv(sq, tq), pl.cdiv(sk, tk)),
            in_specs=[q_spec, k_spec],               # K reused as V inside kernel
            out_specs=o_spec,
            scratch_shapes=[
                pltpu.VMEM((tq, dp), compute_dtype),   # q (scaled + cast, hoisted)
                pltpu.VMEM((tq, 1), jnp.float32),      # m (running max)
                pltpu.VMEM((tq, 1), jnp.float32),      # l (running denom)
                pltpu.VMEM((tq, dp), jnp.float32),     # acc
            ],
        ),
        compiler_params=pltpu.CompilerParams(**cp_kwargs),
    )(q_arr, k_arr)

    return out[..., :D] if dp != D else out


def _reference(x1, x2=None, dim=1):
    q = x1
    k = x1 if x2 is None else x2
    v = k
    qk = jnp.einsum("bqd,bkd->bqk", q, k, precision=jax.lax.Precision.HIGHEST)
    scale = jnp.float32(k.shape[dim]) ** -0.5
    sm = jax.nn.softmax(qk * scale, axis=-1)
    return jnp.einsum("bqk,bkd->bqd", sm, v, precision=jax.lax.Precision.HIGHEST)


if __name__ == "__main__":
    key = jax.random.PRNGKey(0)
    k1, k2, k3 = jax.random.split(key, 3)

    # Small shapes consistent with the module's (batch, seq, hidden) layout.
    B, S, D = 2, 8, 64
    x1 = jax.random.normal(k1, (B, S, D), dtype=jnp.float32)
    x2 = jax.random.normal(k2, (B, S, D), dtype=jnp.float32)
    ref = _reference(x1, x2, dim=1)

    # 1) Exact-f32 MXU path (flag off): tighter check against the reference.
    out_f32 = jax.block_until_ready(
        scores_forward(x1, x2, dim=1, use_bf16_matmul=False))
    assert out_f32.shape == (B, S, D)
    assert jnp.allclose(out_f32, ref, atol=2e-2, rtol=2e-2), "f32 mismatch vs reference"

    # 2) Default bf16-MXU path (bf16 operands, f32 accumulation, approx recip).
    out_bf16 = jax.block_until_ready(scores_forward(x1, x2, dim=1))
    assert jnp.allclose(out_bf16, ref, atol=5e-2, rtol=5e-2), "bf16 mismatch vs reference"

    # 3) Self-attention path (x2 is None).
    out_self = jax.block_until_ready(scores_forward(x1, None, dim=1))
    ref_self = _reference(x1, None, dim=1)
    assert jnp.allclose(out_self, ref_self, atol=5e-2, rtol=5e-2), "self-attn mismatch"

    # 4) Non-divisible sequence length: exercises the cdiv grid + masked kv tail.
    x3 = jax.random.normal(k3, (1, 24, D), dtype=jnp.float32)
    out_tail = jax.block_until_ready(
        scores_forward(x3, None, dim=1, max_q_tile=16, max_kv_tile=16))
    ref_tail = _reference(x3, None, dim=1)
    assert jnp.allclose(out_tail, ref_tail, atol=5e-2, rtol=5e-2), "masked-tail mismatch"

    print("KERNEL_OK")
</pallas_src>

<mosaic_0001>
module attributes {stable_mosaic.version = 11 : i64} {
  func.func @_scores_kernel(%arg0: i32, %arg1: i32, %arg2: i32, %arg3: memref<1x8x128xf32, #tpu.memory_space<vmem>>, %arg4: memref<1x8x128xf32, #tpu.memory_space<vmem>>, %arg5: memref<1x8x128xf32, #tpu.memory_space<vmem>>, %arg6: memref<8x128xf32, #tpu.memory_space<vmem>>, %arg7: memref<8x1xf32, #tpu.memory_space<vmem>>, %arg8: memref<8x1xf32, #tpu.memory_space<vmem>>, %arg9: memref<8x128xf32, #tpu.memory_space<vmem>>) attributes {dimension_semantics = [#tpu.dimension_semantics<parallel>, #tpu.dimension_semantics<parallel>, #tpu.dimension_semantics<arbitrary>], iteration_bounds = array<i64: 2, 1, 1>, scalar_prefetch = 0 : i64, scratch_operands = 4 : i64, tpu.core_type = #tpu.core_type<tc>, window_params = [{transform_indices = @transform_0, window_bounds = array<i64: 1, 8, 128>}, {transform_indices = @transform_1, window_bounds = array<i64: 1, 8, 128>}, {transform_indices = @transform_2, window_bounds = array<i64: 1, 8, 128>}]} {
    %c0_i32 = arith.constant 0 : i32
    %0 = arith.cmpi eq, %arg2, %c0_i32 : i32
    %1 = arith.extui %0 : i1 to i32
    %c0_i32_0 = arith.constant 0 : i32
    %2 = arith.cmpi ne, %1, %c0_i32_0 : i32
    scf.if %2 {
      %c0_22 = arith.constant 0 : index
      %c0_23 = arith.constant 0 : index
      %c0_24 = arith.constant 0 : index
      %32 = vector.load %arg3[%c0_22, %c0_23, %c0_24] : memref<1x8x128xf32, #tpu.memory_space<vmem>>, vector<1x8x128xf32>
      %33 = vector.shape_cast %32 : vector<1x8x128xf32> to vector<8x128xf32>
      %cst_25 = arith.constant 0.353553385 : f32
      %34 = vector.broadcast %cst_25 : f32 to vector<8x128xf32>
      %35 = arith.mulf %33, %34 : vector<8x128xf32>
      %c0_26 = arith.constant 0 : index
      %c0_27 = arith.constant 0 : index
      %36 = vector.load %arg6[%c0_26, %c0_27] : memref<8x128xf32, #tpu.memory_space<vmem>>, vector<8x128xf32>
      tpu.vector_store %arg6[%c0_26, %c0_27], %35 {strides = array<i32>} : memref<8x128xf32, #tpu.memory_space<vmem>>, vector<8x128xf32>,
      %cst_28 = arith.constant 0xFF800000 : f32
      %37 = vector.broadcast %cst_28 : f32 to vector<8x1xf32>
      %c0_29 = arith.constant 0 : index
      %c0_30 = arith.constant 0 : index
      %38 = vector.load %arg7[%c0_29, %c0_30] : memref<8x1xf32, #tpu.memory_space<vmem>>, vector<8x1xf32>
      tpu.vector_store %arg7[%c0_29, %c0_30], %37 {strides = array<i32>} : memref<8x1xf32, #tpu.memory_space<vmem>>, vector<8x1xf32>,
      %cst_31 = arith.constant 0.000000e+00 : f32
      %39 = vector.broadcast %cst_31 : f32 to vector<8x1xf32>
      %c0_32 = arith.constant 0 : index
      %c0_33 = arith.constant 0 : index
      %40 = vector.load %arg8[%c0_32, %c0_33] : memref<8x1xf32, #tpu.memory_space<vmem>>, vector<8x1xf32>
      tpu.vector_store %arg8[%c0_32, %c0_33], %39 {strides = array<i32>} : memref<8x1xf32, #tpu.memory_space<vmem>>, vector<8x1xf32>,
      %cst_34 = arith.constant 0.000000e+00 : f32
      %41 = vector.broadcast %cst_34 : f32 to vector<8x128xf32>
      %c0_35 = arith.constant 0 : index
      %c0_36 = arith.constant 0 : index
      %42 = vector.load %arg9[%c0_35, %c0_36] : memref<8x128xf32, #tpu.memory_space<vmem>>, vector<8x128xf32>
      tpu.vector_store %arg9[%c0_35, %c0_36], %41 {strides = array<i32>} : memref<8x128xf32, #tpu.memory_space<vmem>>, vector<8x128xf32>,
    } else {
    }
    %c0 = arith.constant 0 : index
    %c0_1 = arith.constant 0 : index
    %3 = vector.load %arg6[%c0, %c0_1] : memref<8x128xf32, #tpu.memory_space<vmem>>, vector<8x128xf32>
    %c0_2 = arith.constant 0 : index
    %c0_3 = arith.constant 0 : index
    %c0_4 = arith.constant 0 : index
    %4 = vector.load %arg4[%c0_2, %c0_3, %c0_4] : memref<1x8x128xf32, #tpu.memory_space<vmem>>, vector<1x8x128xf32>
    %5 = vector.shape_cast %4 : vector<1x8x128xf32> to vector<8x128xf32>
    %cst = arith.constant dense<0.000000e+00> : vector<8x8xf32>
    %6 = tpu.matmul %3, %5, %cst {dimension_numbers = #tpu.dot_dimension_numbers<[1], [1], [0], [0], [0, 0, 1, 0], [], []>} : vector<8x128xf32>, vector<8x128xf32>, vector<8x8xf32> -> vector<8x8xf32>
    %c0_5 = arith.constant 0 : index
    %c0_6 = arith.constant 0 : index
    %7 = vector.load %arg7[%c0_5, %c0_6] : memref<8x1xf32, #tpu.memory_space<vmem>>, vector<8x1xf32>
    %cst_7 = arith.constant dense<0xFF800000> : vector<8xf32>
    %8 = vector.multi_reduction <maximumf>, %6, %cst_7 [1] : vector<8x8xf32> to vector<8xf32>
    %9 = vector.shape_cast %8 : vector<8xf32> to vector<8x1xf32>
    %10 = arith.maximumf %7, %9 : vector<8x1xf32>
    %11 = arith.subf %7, %10 : vector<8x1xf32>
    %12 = math.exp %11 : vector<8x1xf32>
    %13 = vector.broadcast %10 : vector<8x1xf32> to vector<8x8xf32>
    %14 = arith.subf %6, %13 : vector<8x8xf32>
    %15 = math.exp %14 : vector<8x8xf32>
    %c0_8 = arith.constant 0 : index
    %c0_9 = arith.constant 0 : index
    %16 = vector.load %arg8[%c0_8, %c0_9] : memref<8x1xf32, #tpu.memory_space<vmem>>, vector<8x1xf32>
    %17 = arith.mulf %12, %16 : vector<8x1xf32>
    %cst_10 = arith.constant dense<0.000000e+00> : vector<8xf32>
    %18 = vector.multi_reduction <add>, %15, %cst_10 [1] : vector<8x8xf32> to vector<8xf32>
    %19 = vector.shape_cast %18 : vector<8xf32> to vector<8x1xf32>
    %20 = arith.addf %17, %19 : vector<8x1xf32>
    %c0_11 = arith.constant 0 : index
    %c0_12 = arith.constant 0 : index
    %21 = vector.load %arg8[%c0_11, %c0_12] : memref<8x1xf32, #tpu.memory_space<vmem>>, vector<8x1xf32>
    tpu.vector_store %arg8[%c0_11, %c0_12], %20 {strides = array<i32>} : memref<8x1xf32, #tpu.memory_space<vmem>>, vector<8x1xf32>,
    %c0_13 = arith.constant 0 : index
    %c0_14 = arith.constant 0 : index
    %22 = vector.load %arg9[%c0_13, %c0_14] : memref<8x128xf32, #tpu.memory_space<vmem>>, vector<8x128xf32>
    %23 = vector.broadcast %12 : vector<8x1xf32> to vector<8x128xf32>
    %24 = arith.mulf %23, %22 : vector<8x128xf32>
    %cst_15 = arith.constant dense<0.000000e+00> : vector<8x128xf32>
    %25 = tpu.matmul %15, %5, %cst_15 {dimension_numbers = #tpu.dot_dimension_numbers<[1], [0], [0], [1], [0, 0, 1, 1], [], []>} : vector<8x8xf32>, vector<8x128xf32>, vector<8x128xf32> -> vector<8x128xf32>
    %26 = arith.addf %24, %25 : vector<8x128xf32>
    %c0_16 = arith.constant 0 : index
    %c0_17 = arith.constant 0 : index
    %27 = vector.load %arg9[%c0_16, %c0_17] : memref<8x128xf32, #tpu.memory_space<vmem>>, vector<8x128xf32>
    tpu.vector_store %arg9[%c0_16, %c0_17], %26 {strides = array<i32>} : memref<8x128xf32, #tpu.memory_space<vmem>>, vector<8x128xf32>,
    %c0_18 = arith.constant 0 : index
    %c0_19 = arith.constant 0 : index
    %28 = vector.load %arg7[%c0_18, %c0_19] : memref<8x1xf32, #tpu.memory_space<vmem>>, vector<8x1xf32>
    tpu.vector_store %arg7[%c0_18, %c0_19], %10 {strides = array<i32>} : memref<8x1xf32, #tpu.memory_space<vmem>>, vector<8x1xf32>,
    %c0_i32_20 = arith.constant 0 : i32
    %29 = arith.cmpi eq, %arg2, %c0_i32_20 : i32
    %30 = arith.extui %29 : i1 to i32
    %c0_i32_21 = arith.constant 0 : i32
    %31 = arith.cmpi ne, %30, %c0_i32_21 : i32
    scf.if %31 {
      %c0_22 = arith.constant 0 : index
      %c0_23 = arith.constant 0 : index
      %32 = vector.load %arg9[%c0_22, %c0_23] : memref<8x128xf32, #tpu.memory_space<vmem>>, vector<8x128xf32>
      %c0_24 = arith.constant 0 : index
      %c0_25 = arith.constant 0 : index
      %33 = vector.load %arg8[%c0_24, %c0_25] : memref<8x1xf32, #tpu.memory_space<vmem>>, vector<8x1xf32>
      %34 = tpu.reciprocal %33 {approx = true} : vector<8x1xf32> -> vector<8x1xf32>
      %35 = vector.broadcast %34 : vector<8x1xf32> to vector<8x128xf32>
      %36 = arith.mulf %32, %35 : vector<8x128xf32>
      %c0_26 = arith.constant 0 : index
      %c0_27 = arith.constant 0 : index
      %c0_28 = arith.constant 0 : index
      %37 = vector.load %arg5[%c0_26, %c0_27, %c0_28] : memref<1x8x128xf32, #tpu.memory_space<vmem>>, vector<1x8x128xf32>
      %38 = vector.shape_cast %37 : vector<1x8x128xf32> to vector<8x128xf32>
      %39 = vector.shape_cast %36 : vector<8x128xf32> to vector<1x8x128xf32>
      tpu.vector_store %arg5[%c0_26, %c0_27, %c0_28], %39 {strides = array<i32>} : memref<1x8x128xf32, #tpu.memory_space<vmem>>, vector<1x8x128xf32>,
    } else {
    }
    return
  }
  func.func @transform_0(%arg0: i32, %arg1: i32, %arg2: i32) -> (i32, i32, i32) {
    %c0_i32 = arith.constant 0 : i32
    %c0_i32_0 = arith.constant 0 : i32
    return %arg0, %arg1, %c0_i32 : i32, i32, i32
  }
  func.func @transform_1(%arg0: i32, %arg1: i32, %arg2: i32) -> (i32, i32, i32) {
    %c0_i32 = arith.constant 0 : i32
    %c0_i32_0 = arith.constant 0 : i32
    return %arg0, %arg2, %c0_i32 : i32, i32, i32
  }
  func.func @transform_2(%arg0: i32, %arg1: i32, %arg2: i32) -> (i32, i32, i32) {
    %c0_i32 = arith.constant 0 : i32
    %c0_i32_0 = arith.constant 0 : i32
    return %arg0, %arg1, %c0_i32 : i32, i32, i32
  }
}

</mosaic_0001>

<llo_original>
// kernel: tpu_custom_call.1
$region0: #{tpu_custom_call.1}
  #allocation0 [shape = 'u32[]', space=smem, size = 0x4, offset = 0x4, fixed_abs, tag = 'smem constant byte address 0x4 - core index']
  #allocation1 [shape = 'u32[144,128]{1,0:T(1,128)}', space=vmem, size = 0x12000, scoped, tag = 'internal scratch']
  #allocation2 [shape = 'f32[8,128]{1,0:T(8,128)}', space=vmem, size = 0x1000, scoped, tag = 'scratch operand']
  #allocation3 [shape = 'f32[8,1]{1,0:T(8,128)}', space=vmem, size = 0x1000, scoped, tag = 'scratch operand']
  #allocation4 [shape = 'f32[8,1]{1,0:T(8,128)}', space=vmem, size = 0x1000, scoped, tag = 'scratch operand']
  #allocation5 [shape = 'f32[8,128]{1,0:T(8,128)}', space=vmem, size = 0x1000, scoped, tag = 'scratch operand']
  %s0 = inlined_call_operand.hbm [shape: f32[2,8,128], index: 0, kind: input, shape index: {}]
  %s1 = inlined_call_operand.hbm [shape: f32[2,8,128], index: 1, kind: input, shape index: {}]
  %s2 = inlined_call_operand.hbm [shape: f32[2,8,128], index: 2, kind: output, shape index: {}]
  %s3 = sld [smem:[#allocation0]]
  $region57: #{tpu_custom_call.1} parent=0
    _
  %s5 = ssub.s32 1, %s3
  %s6 = scalar_select 0, %s5, %s3
  $region1: #{tpu_custom_call.1} parent=0
    #allocation6 [shape = 'u8[8192]{0}', space=vmem, size = 0x2000, scoped, tag = 'input window, operand 0']
    #allocation7 [shape = 's32[2]{0}', space=sflag, size = 0x8, scoped, tag = 'scoped memory for tpu_custom_call.1']
    #allocation8 [shape = 's32[2]{0}', space=sflag, size = 0x8, scoped, tag = 'scoped memory for tpu_custom_call.1']
    #allocation9 [shape = 'u8[8192]{0}', space=vmem, size = 0x2000, scoped, tag = 'input window, operand 1']
    #allocation10 [shape = 's32[2]{0}', space=sflag, size = 0x8, scoped, tag = 'scoped memory for tpu_custom_call.1']
    #allocation11 [shape = 'u8[8192]{0}', space=vmem, size = 0x2000, scoped, tag = 'output window, operand 0']
    %7 = vsyncpa [#allocation7], 0
    %s8 = scalar_lea.sflag [#allocation7], 1
    %9 = vsyncpa %s8, 0
    %10 = vsyncpa [#allocation10], 0
    %s11 = scalar_lea.sflag [#allocation10], 1
    %12 = vsyncpa %s11, 0
    %13 = vsyncpa [#allocation8], 0
    %s14 = scalar_lea.sflag [#allocation8], 1
    %15 = vsyncpa %s14, 0
    loop: start=0, step=1, limit=4
    $region2: #{tpu_custom_call.1} parent=1 // loop_pre_header
      _
    $region3: #{tpu_custom_call.1} parent=1 // loop_header
      %s17 = sphi 0, %s21
      %p18 = scmp.ge.s32.totalorder %s17, 4
      %s24 = sphi 0, %s43
      %s25 = sphi 0, %s39
      %s26 = sphi 0, %s35
      %s27 = sphi 0, %s24
      %s28 = sphi 0, %s25
      %s29 = sphi 0, %s26
      %s30 = sphi 0, %s27
      %s31 = sphi 0, %s28
      %s32 = sphi 0, %s29
      %s48 = sphi 0, %s50
      %s51 = sphi 0, %s48
      %s52 = sphi 0, %s51
      %s68 = sphi 0, %s52
      %s76 = sphi 0, %s78
      %s79 = sphi 0, %s76
      %s80 = sphi 0, %s79
      %s96 = sphi 0, %s80
      %s104 = sphi 0, %s106
      %s107 = sphi 0, %s104
      %s108 = sphi 0, %s107
      %s124 = sphi 0, %s108
    $region4: #{tpu_custom_call.1} parent=1 // loop_header_branch
      %20 = sbr.rel (%p18) target = $region8
    $region5: #{tpu_custom_call.1} parent=1 // loop_body
      %s22 = ssub.s32 %s17, 1
      %s23 = ssub.s32 %s17, 2
      %s33 = sadd.s32 1, %s26
      %p34 = scmp.ge.s32.totalorder %s33, 1
      %s35 = scalar_select %p34, 0, %s33
      %s36 = sadd.s32 1, %s25
      %s37 = scalar_select %p34, %s36, %s25
      %p38 = scmp.ge.s32.totalorder %s37, 1
      %s39 = scalar_select %p38, 0, %s37
      %s40 = sadd.s32 1, %s24
      %s41 = scalar_select %p38, %s40, %s24
      %p42 = scmp.ge.s32.totalorder %s41, 2
      %s43 = scalar_select %p42, 0, %s41
      %s44 = ssub.s32 %s24, %s43
      %s45 = ssub.s32 %s25, %s39
      %s46 = sor.u32 %s44, %s45
      %p47 = scmp.eq.s32.totalorder %s46, 0
      %s49 = sadd.s32 %s48, 1
      %s50 = scalar_select %p47, %s48, %s49
      %p53 = pneg %p47
      %p54 = scmp.eq.s32.totalorder %s17, 1
      %p55 = por %p53, %p54
      %p56 = scmp.ne.s32.totalorder %s48, %s51
      %p57 = scmp.eq.s32.totalorder %s17, 0
      %p58 = por %p56, %p57
      %p59 = scmp.ne.s32.totalorder %s48, %s51
      %p60 = scmp.eq.s32.totalorder %s22, 1
      %p61 = por %p59, %p60
      %p62 = scmp.ne.s32.totalorder %s51, %s52
      %p63 = scmp.eq.s32.totalorder %s22, 0
      %p64 = por %p62, %p63
      %p65 = scmp.ne.s32.totalorder %s51, %s52
      %p66 = scmp.eq.s32.totalorder %s23, 1
      %p67 = por %p65, %p66
      %p69 = scmp.ne.s32.totalorder %s52, %s68
      %p70 = scmp.eq.s32.totalorder %s23, 0
      %p71 = por %p69, %p70
      %s72 = ssub.s32 %s24, %s43
      %s73 = ssub.s32 %s26, %s35
      %s74 = sor.u32 %s72, %s73
      %p75 = scmp.eq.s32.totalorder %s74, 0
      %s77 = sadd.s32 %s76, 1
      %s78 = scalar_select %p75, %s76, %s77
      %p81 = pneg %p75
      %p82 = scmp.eq.s32.totalorder %s17, 1
      %p83 = por %p81, %p82
      %p84 = scmp.ne.s32.totalorder %s76, %s79
      %p85 = scmp.eq.s32.totalorder %s17, 0
      %p86 = por %p84, %p85
      %p87 = scmp.ne.s32.totalorder %s76, %s79
      %p88 = scmp.eq.s32.totalorder %s22, 1
      %p89 = por %p87, %p88
      %p90 = scmp.ne.s32.totalorder %s79, %s80
      %p91 = scmp.eq.s32.totalorder %s22, 0
      %p92 = por %p90, %p91
      %p93 = scmp.ne.s32.totalorder %s79, %s80
      %p94 = scmp.eq.s32.totalorder %s23, 1
      %p95 = por %p93, %p94
      %p97 = scmp.ne.s32.totalorder %s80, %s96
      %p98 = scmp.eq.s32.totalorder %s23, 0
      %p99 = por %p97, %p98
      %s100 = ssub.s32 %s24, %s43
      %s101 = ssub.s32 %s25, %s39
      %s102 = sor.u32 %s100, %s101
      %p103 = scmp.eq.s32.totalorder %s102, 0
      %s105 = sadd.s32 %s104, 1
      %s106 = scalar_select %p103, %s104, %s105
      %p109 = pneg %p103
      %p110 = scmp.eq.s32.totalorder %s17, 1
      %p111 = por %p109, %p110
      %p112 = scmp.ne.s32.totalorder %s104, %s107
      %p113 = scmp.eq.s32.totalorder %s17, 0
      %p114 = por %p112, %p113
      %p115 = scmp.ne.s32.totalorder %s104, %s107
      %p116 = scmp.eq.s32.totalorder %s22, 1
      %p117 = por %p115, %p116
      %p118 = scmp.ne.s32.totalorder %s107, %s108
      %p119 = scmp.eq.s32.totalorder %s22, 0
      %p120 = por %p118, %p119
      %p121 = scmp.ne.s32.totalorder %s107, %s108
      %p122 = scmp.eq.s32.totalorder %s23, 1
      %p123 = por %p121, %p122
      %p125 = scmp.ne.s32.totalorder %s108, %s124
      %p126 = scmp.eq.s32.totalorder %s23, 0
      %p127 = por %p125, %p126
      %p128 = scmp.le.s32.totalorder 1, %s17
      %p129 = scmp.lt.s32.totalorder %s17, 3
      %p130 = pnand %p128, %p129
      %p131 = pneg %p130
      // Predicated region
      $region9: #{tpu_custom_call.1} parent=5 // pred_check
        _
      $region10: #{tpu_custom_call.1} parent=5 // pred_check_branch
        %133 = sbr.rel (%p130) target = $region12
      $region11: #{tpu_custom_call.1} parent=5 // pred_region
        %s134 = ssub.s32 %s17, 1
      $region12: #{tpu_custom_call.1} parent=5 // pred_fallthru
        _
      %p135 = scmp.lt.s32.totalorder %s17, 2
      // Predicated region
      $region13: #{tpu_custom_call.1} parent=5 // pred_check
        %p136 = pneg %p135
      $region14: #{tpu_custom_call.1} parent=5 // pred_check_branch
        %138 = sbr.rel (%p136) target = $region16
      $region15: #{tpu_custom_call.1} parent=5 // pred_region
        // Predicated region
        $region17: #{tpu_custom_call.1} parent=15 // pred_check
          %p139 = pneg %p58
        $region18: #{tpu_custom_call.1} parent=15 // pred_check_branch
          %141 = sbr.rel (%p139) target = $region20
        $region19: #{tpu_custom_call.1} parent=15 // pred_region
          %s142 = sand.u32 %s48, 1
          %s143 = scalar_lea.sflag [#allocation7], %s142
          %s144 = sand.u32 %s48, 1
          %s145 = smul.addr %s144, 8
          %s146 = scalar_lea.vmem [#allocation6], %s145
          %s148 = ssub.s32 128, 128
          %149 = vsyncadd %s143, %s148
          %s150 = sadd.s32 %s25, %s24
          %s151 = smul.addr %s150, 128
          %s152 = scalar_lea.hbm %s0, %s151
          %s154 = sshll.u32 %s146, 4
          %s155 = int_to_ptr.vmem [resolvable:$true] %s154
          %157 = dma.hbm_to_vmem [thread:$0]  %s152, 128, %s155, %s143
        $region20: #{tpu_custom_call.1} parent=15 // pred_fallthru
          _
        // Predicated region
        $region21: #{tpu_custom_call.1} parent=15 // pred_check
          %p158 = pneg %p86
        $region22: #{tpu_custom_call.1} parent=15 // pred_check_branch
          %160 = sbr.rel (%p158) target = $region24
        $region23: #{tpu_custom_call.1} parent=15 // pred_region
          %s161 = sand.u32 %s76, 1
          %s162 = scalar_lea.sflag [#allocation10], %s161
          %s163 = sand.u32 %s76, 1
          %s164 = smul.addr %s163, 8
          %s165 = scalar_lea.vmem [#allocation9], %s164
          %s167 = ssub.s32 128, 128
          %168 = vsyncadd %s162, %s167
          %s169 = sadd.s32 %s26, %s24
          %s170 = smul.addr %s169, 128
          %s171 = scalar_lea.hbm %s1, %s170
          %s173 = sshll.u32 %s165, 4
          %s174 = int_to_ptr.vmem [resolvable:$true] %s173
          %176 = dma.hbm_to_vmem [thread:$0]  %s171, 128, %s174, %s162
        $region24: #{tpu_custom_call.1} parent=15 // pred_fallthru
          _
      $region16: #{tpu_custom_call.1} parent=5 // pred_fallthru
        _
      %p177 = scmp.le.s32.totalorder 1, %s17
      %p178 = scmp.lt.s32.totalorder %s17, 3
      %p179 = pnand %p177, %p178
      %p180 = pneg %p179
      // Predicated region
      $region25: #{tpu_custom_call.1} parent=5 // pred_check
        _
      $region26: #{tpu_custom_call.1} parent=5 // pred_check_branch
        %182 = sbr.rel (%p179) target = $region28
      $region27: #{tpu_custom_call.1} parent=5 // pred_region
        %s183 = ssub.s32 %s17, 1
        %s184 = sand.u32 %s51, 1
        %s185 = scalar_lea.sflag [#allocation7], %s184
        %s186 = sand.u32 %s51, 1
        %s187 = smul.addr %s186, 8
        %s188 = scalar_lea.vmem [#allocation6], %s187
        // Predicated region
        $region29: #{tpu_custom_call.1} parent=27 // pred_check
          %p189 = pneg %p64
        $region30: #{tpu_custom_call.1} parent=27 // pred_check_branch
          %191 = sbr.rel (%p189) target = $region32
        $region31: #{tpu_custom_call.1} parent=27 // pred_region
          %192 = dma.done %s185, 128
        $region32: #{tpu_custom_call.1} parent=27 // pred_fallthru
          _
        %s193 = sand.u32 %s79, 1
        %s194 = scalar_lea.sflag [#allocation10], %s193
        %s195 = sand.u32 %s79, 1
        %s196 = smul.addr %s195, 8
        %s197 = scalar_lea.vmem [#allocation9], %s196
        // Predicated region
        $region33: #{tpu_custom_call.1} parent=27 // pred_check
          %p198 = pneg %p92
        $region34: #{tpu_custom_call.1} parent=27 // pred_check_branch
          %200 = sbr.rel (%p198) target = $region36
        $region35: #{tpu_custom_call.1} parent=27 // pred_region
          %201 = dma.done %s194, 128
        $region36: #{tpu_custom_call.1} parent=27 // pred_fallthru
          _
        %s202 = sand.u32 %s51, 1
        %s203 = scalar_lea.sflag [#allocation7], %s202
        %s204 = sand.u32 %s51, 1
        %s205 = smul.addr %s204, 8
        %s206 = scalar_lea.vmem [#allocation6], %s205
        %p207 = pneg %p64
        %p208 = pneg %p61
        %s209 = sand.u32 %s79, 1
        %s210 = scalar_lea.sflag [#allocation10], %s209
        %s211 = sand.u32 %s79, 1
        %s212 = smul.addr %s211, 8
        %s213 = scalar_lea.vmem [#allocation9], %s212
        %p214 = pneg %p92
        %p215 = pneg %p89
        %p216 = pneg %p120
        %p217 = pneg %p117
        %s218 = sand.u32 %s107, 1
        %s219 = scalar_lea.sflag [#allocation8], %s218
        %s220 = sand.u32 %s107, 1
        %s221 = smul.addr %s220, 8
        %s222 = scalar_lea.vmem [#allocation11], %s221
        %p223 = scmp.eq.s32.totalorder %s29, 0
        // Predicated region
        $region37: #{tpu_custom_call.1} parent=27 // pred_check
          %p224 = pneg %p223
        $region38: #{tpu_custom_call.1} parent=27 // pred_check_branch
          %226 = sbr.rel (%p224) target = $region40
        $region39: #{tpu_custom_call.1} parent=27 // pred_region
          %v227 = vld [vmem:[%s188] sm:$0xff]
          %v228 = vmul.f32 %v227, 0.35355338
          %229 = vst [vmem:[#allocation2] sm:$0xff] %v228
          %vm230 = vcmask 7168
          %231 = vst.msk [vmem:[#allocation3] sm:$0xff] %vm230, -inf
          %232 = vst.msk [vmem:[#allocation4] sm:$0xff] %vm230, 0.0
          %233 = vst [vmem:[#allocation5] sm:$0xff] 0.0
        $region40: #{tpu_custom_call.1} parent=27 // pred_fallthru
          _
        %v234 = vld [vmem:[#allocation2] sm:$0xff]
        %v235 = vld [vmem:[%s197] sm:$0xff]
        %236 = vmatprep.subr.mxu0 0.0
        %237 = vmatpush1.xpose.msra.mxu0 %v235
        %238 = vmatprep.subr.mxu0 0.0
        %239 = vmatpush1.xpose.msra.mxu0 0.0
        %240 = vmatprep.subr.mxu0 0.0
        %241 = vmatpush1.xpose.msra.mxu0 0.0
        %242 = vmatprep.subr.mxu0 0.0
        %243 = vmatpush1.xpose.msra.mxu0 0.0
        %244 = vmatprep.subr.mxu0 0.0
        %245 = vmatpush1.xpose.msra.mxu0 0.0
        %246 = vmatprep.subr.mxu0 0.0
        %247 = vmatpush1.xpose.msra.mxu0 0.0
        %248 = vmatprep.subr.mxu0 0.0
        %249 = vmatpush1.xpose.msra.mxu0 0.0
        %250 = vmatprep.subr.mxu0 0.0
        %251 = vmatpush1.xpose.msra.mxu0 0.0
        %252 = vmatprep.subr.mxu0 0.0
        %253 = vmatpush1.xpose.msra.mxu0 0.0
        %254 = vmatprep.subr.mxu0 0.0
        %255 = vmatpush1.xpose.msra.mxu0 0.0
        %256 = vmatprep.subr.mxu0 0.0
        %257 = vmatpush1.xpose.msra.mxu0 0.0
        %258 = vmatprep.subr.mxu0 0.0
        %259 = vmatpush1.xpose.msra.mxu0 0.0
        %260 = vmatprep.subr.mxu0 0.0
        %261 = vmatpush1.xpose.msra.mxu0 0.0
        %262 = vmatprep.subr.mxu0 0.0
        %263 = vmatpush1.xpose.msra.mxu0 0.0
        %264 = vmatprep.subr.mxu0 0.0
        %265 = vmatpush1.xpose.msra.mxu0 0.0
        %266 = vmatprep.subr.mxu0 0.0
        %267 = vmatpush1.xpose.msra.mxu0 0.0
        %268 = vmatprep.subr.mxu0 0.0
        %269 = vmatpush1.xpose.msra.mxu0 0.0
        %270 = vmatprep.subr.mxu0 0.0
        %271 = vmatpush1.xpose.msra.mxu0 0.0
        %272 = vmatprep.subr.mxu0 0.0
        %273 = vmatpush1.xpose.msra.mxu0 0.0
        %274 = vmatprep.subr.mxu0 0.0
        %275 = vmatpush1.xpose.msra.mxu0 0.0
        %276 = vmatprep.subr.mxu0 0.0
        %277 = vmatpush1.xpose.msra.mxu0 0.0
        %278 = vmatprep.subr.mxu0 0.0
        %279 = vmatpush1.xpose.msra.mxu0 0.0
        %280 = vmatprep.subr.mxu0 0.0
        %281 = vmatpush1.xpose.msra.mxu0 0.0
        %282 = vmatprep.subr.mxu0 0.0
        %283 = vmatpush1.xpose.msra.mxu0 0.0
        %284 = vmatprep.subr.mxu0 0.0
        %285 = vmatpush1.xpose.msra.mxu0 0.0
        %286 = vmatprep.subr.mxu0 0.0
        %287 = vmatpush1.xpose.msra.mxu0 0.0
        %288 = vmatprep.subr.mxu0 0.0
        %289 = vmatpush1.xpose.msra.mxu0 0.0
        %290 = vmatprep.subr.mxu0 0.0
        %291 = vmatpush1.xpose.msra.mxu0 0.0
        %292 = vmatprep.subr.mxu0 0.0
        %293 = vmatpush1.xpose.msra.mxu0 0.0
        %294 = vmatprep.subr.mxu0 0.0
        %295 = vmatpush1.xpose.msra.mxu0 0.0
        %296 = vmatprep.subr.mxu0 0.0
        %297 = vmatpush1.xpose.msra.mxu0 0.0
        %298 = vmatprep.subr.mxu0 0.0
        %299 = vmatpush1.xpose.msra.mxu0 0.0
        %300 = vmatprep.mubr.f32.mxu0 0.0
        %301 = vmatmul.mubr.f32.gmra.mrb[0].mxu0 %v234
        %v302 = vpop.f32.mrb[0].mxu0
        %v303 = vadd.f32 0.0, %v302
        %v304 = vpop.f32.mrb[0].mxu0
        %305 = vdwg.mxu0
        %v306 = vld [vmem:[#allocation3] sm:$0xff]
        %vm307 = vcmask 64512
        %v308 = vsel %vm307, %v303, -inf
        %309 = vmax.xlane.f32.xlu0 %v308
        %v310 = vpop.xlane.xlu0 %309
        %v311 = vmax.f32 %v306, %v310
        %v312 = vsub.f32 %v306, %v311
        %v313 = vmul.f32 %v312, 1.442695
        %v314 = vpow.pop %v313
        %316 = vset.pattern.permute.xlu0 0
        %317 = vperm.xlu0 %316, %v311
        %v318 = vpop.permute.xlu0 %317
        %v320 = vsub.f32 %v303, %v318
        %v321 = vmul.f32 %v320, 1.442695
        %v322 = vpow.pop %v321
        %v323 = vld [vmem:[#allocation4] sm:$0xff]
        %v324 = vmul.f32 %v314, %v323
        %v325 = vsel %vm307, %v322, 0.0
        %326 = vadd.xlane.f32.xlu0 %v325
        %v327 = vpop.xlane.xlu0 %326
        %v328 = vadd.f32 %v324, %v327
        %vm329 = vcmask 7168
        %330 = vst.msk [vmem:[#allocation4] sm:$0xff] %vm329, %v328
        %v331 = vld [vmem:[#allocation5] sm:$0xff]
        %333 = vset.pattern.permute.xlu0 0
        %334 = vperm.xlu0 %333, %v314
        %v335 = vpop.permute.xlu0 %334
        %v337 = vmul.f32 %v335, %v331
        %v339 = vsel %vm307, %v322, 0
        %341 = vmatprep.subr.mxu0 0.0
        %342 = vmatpush1.msra.mxu0 %v235
        %343 = vmatprep.subr.mxu0 0.0
        %344 = vmatpush1.msra.mxu0 0.0
        %345 = vmatprep.subr.mxu0 0.0
        %346 = vmatpush1.msra.mxu0 0.0
        %347 = vmatprep.subr.mxu0 0.0
        %348 = vmatpush1.msra.mxu0 0.0
        %349 = vmatprep.subr.mxu0 0.0
        %350 = vmatpush1.msra.mxu0 0.0
        %351 = vmatprep.subr.mxu0 0.0
        %352 = vmatpush1.msra.mxu0 0.0
        %353 = vmatprep.subr.mxu0 0.0
        %354 = vmatpush1.msra.mxu0 0.0
        %355 = vmatprep.subr.mxu0 0.0
        %356 = vmatpush1.msra.mxu0 0.0
        %357 = vmatprep.subr.mxu0 0.0
        %358 = vmatpush1.msra.mxu0 0.0
        %359 = vmatprep.subr.mxu0 0.0
        %360 = vmatpush1.msra.mxu0 0.0
        %361 = vmatprep.subr.mxu0 0.0
        %362 = vmatpush1.msra.mxu0 0.0
        %363 = vmatprep.subr.mxu0 0.0
        %364 = vmatpush1.msra.mxu0 0.0
        %365 = vmatprep.subr.mxu0 0.0
        %366 = vmatpush1.msra.mxu0 0.0
        %367 = vmatprep.subr.mxu0 0.0
        %368 = vmatpush1.msra.mxu0 0.0
        %369 = vmatprep.subr.mxu0 0.0
        %370 = vmatpush1.msra.mxu0 0.0
        %371 = vmatprep.subr.mxu0 0.0
        %372 = vmatpush1.msra.mxu0 0.0
        %373 = vmatprep.subr.mxu0 0.0
        %374 = vmatpush1.msra.mxu0 0.0
        %375 = vmatprep.subr.mxu0 0.0
        %376 = vmatpush1.msra.mxu0 0.0
        %377 = vmatprep.subr.mxu0 0.0
        %378 = vmatpush1.msra.mxu0 0.0
        %379 = vmatprep.subr.mxu0 0.0
        %380 = vmatpush1.msra.mxu0 0.0
        %381 = vmatprep.subr.mxu0 0.0
        %382 = vmatpush1.msra.mxu0 0.0
        %383 = vmatprep.subr.mxu0 0.0
        %384 = vmatpush1.msra.mxu0 0.0
        %385 = vmatprep.subr.mxu0 0.0
        %386 = vmatpush1.msra.mxu0 0.0
        %387 = vmatprep.subr.mxu0 0.0
        %388 = vmatpush1.msra.mxu0 0.0
        %389 = vmatprep.subr.mxu0 0.0
        %390 = vmatpush1.msra.mxu0 0.0
        %391 = vmatprep.subr.mxu0 0.0
        %392 = vmatpush1.msra.mxu0 0.0
        %393 = vmatprep.subr.mxu0 0.0
        %394 = vmatpush1.msra.mxu0 0.0
        %395 = vmatprep.subr.mxu0 0.0
        %396 = vmatpush1.msra.mxu0 0.0
        %397 = vmatprep.subr.mxu0 0.0
        %398 = vmatpush1.msra.mxu0 0.0
        %399 = vmatprep.subr.mxu0 0.0
        %400 = vmatpush1.msra.mxu0 0.0
        %401 = vmatprep.subr.mxu0 0.0
        %402 = vmatpush1.msra.mxu0 0.0
        %403 = vmatprep.subr.mxu0 0.0
        %404 = vmatpush1.msra.mxu0 0.0
        %405 = vmatprep.mubr.f32.mxu0 0.0
        %406 = vmatmul.mubr.f32.gmra.mrb[0].mxu0 %v339
        %v407 = vpop.f32.mrb[0].mxu0
        %v408 = vadd.f32 0.0, %v407
        %v409 = vpop.f32.mrb[0].mxu0
        %410 = vdwg.mxu0
        %v411 = vadd.f32 %v337, %v408
        %412 = vst [vmem:[#allocation5] sm:$0xff] %v411
        %413 = vst.msk [vmem:[#allocation3] sm:$0xff] %vm329, %v311
        // Predicated region
        $region41: #{tpu_custom_call.1} parent=27 // pred_check
          %p414 = pneg %p223
        $region42: #{tpu_custom_call.1} parent=27 // pred_check_branch
          %416 = sbr.rel (%p414) target = $region44
        $region43: #{tpu_custom_call.1} parent=27 // pred_region
          %v417 = vld [vmem:[#allocation5] sm:$0xff]
          %v418 = vld [vmem:[#allocation4] sm:$0xff]
          %v419 = vrcp.pop %v418
          %421 = vset.pattern.permute.xlu0 0
          %422 = vperm.xlu0 %421, %v419
          %v423 = vpop.permute.xlu0 %422
          %v425 = vmul.f32 %v417, %v423
          %426 = vst [vmem:[%s222] sm:$0xff] %v425
        $region44: #{tpu_custom_call.1} parent=27 // pred_fallthru
          _
        %s427 = sand.u32 %s107, 1
        %s428 = scalar_lea.sflag [#allocation8], %s427
        %s429 = sand.u32 %s107, 1
        %s430 = smul.addr %s429, 8
        %s431 = scalar_lea.vmem [#allocation11], %s430
        // Predicated region
        $region45: #{tpu_custom_call.1} parent=27 // pred_check
          %p432 = pneg %p117
        $region46: #{tpu_custom_call.1} parent=27 // pred_check_branch
          %434 = sbr.rel (%p432) target = $region48
        $region47: #{tpu_custom_call.1} parent=27 // pred_region
          %s436 = ssub.s32 128, 128
          %437 = vsyncadd %s428, %s436
          %s438 = sadd.s32 %s28, %s27
          %s439 = smul.addr %s438, 128
          %s440 = scalar_lea.hbm %s2, %s439
          %s442 = sshll.u32 %s431, 4
          %s443 = int_to_ptr.vmem [resolvable:$true] %s442
          %445 = dma.vmem_to_hbm [thread:$0]  %s443, 128, %s440, %s428
        $region48: #{tpu_custom_call.1} parent=27 // pred_fallthru
          _
      $region28: #{tpu_custom_call.1} parent=5 // pred_fallthru
        _
      %p446 = scmp.le.s32.totalorder 2, %s17
      // Predicated region
      $region49: #{tpu_custom_call.1} parent=5 // pred_check
        %p447 = pneg %p446
      $region50: #{tpu_custom_call.1} parent=5 // pred_check_branch
        %449 = sbr.rel (%p447) target = $region52
      $region51: #{tpu_custom_call.1} parent=5 // pred_region
        %s450 = ssub.s32 %s17, 2
        // Predicated region
        $region53: #{tpu_custom_call.1} parent=51 // pred_check
          %p451 = pneg %p123
        $region54: #{tpu_custom_call.1} parent=51 // pred_check_branch
          %453 = sbr.rel (%p451) target = $region56
        $region55: #{tpu_custom_call.1} parent=51 // pred_region
          %s454 = sand.u32 %s108, 1
          %s455 = scalar_lea.sflag [#allocation8], %s454
          %s456 = sand.u32 %s108, 1
          %s457 = smul.addr %s456, 8
          %s458 = scalar_lea.vmem [#allocation11], %s457
          %459 = dma.done %s455, 128
        $region56: #{tpu_custom_call.1} parent=51 // pred_fallthru
          _
      $region52: #{tpu_custom_call.1} parent=5 // pred_fallthru
        _
    $region6: #{tpu_custom_call.1} parent=1 // loop_footer
      %s21 = sadd.s32 1, %s17
    $region7: #{tpu_custom_call.1} parent=1 // loop_footer_branch
      %16 = sbr.rel target = $region3
    $region8: #{tpu_custom_call.1} parent=1 // loop_exit
      _
    %460 = vsyncpa [#allocation7], 1
    %s461 = scalar_lea.sflag [#allocation7], 1
    %462 = vsyncpa %s461, 1
    %463 = vsyncpa [#allocation10], 1
    %s464 = scalar_lea.sflag [#allocation10], 1
    %465 = vsyncpa %s464, 1
    %466 = vsyncpa [#allocation8], 1
    %s467 = scalar_lea.sflag [#allocation8], 1
    %468 = vsyncpa %s467, 1

</llo_original>
